<compile_context>
chip_gen: v5e
topology: v5e:2x2
jax: 0.10.0
libtpu: 0.0.40
codegen_flags: <defaults>
</compile_context>

<pallas_src>
import functools

import jax
import jax.numpy as jnp
import numpy as np
from jax import lax
from jax.experimental import pallas as pl
from jax.experimental.pallas import tpu as pltpu


# ----------------------------------------------------------------------------
# Pallas kernel: the whole dual-channel GNN in one grid step.
# refs layout: x, adj_plus_I, pool, norm_mask,
#              [w1,b1,w2,b2] * num_layers (channel-packed), lin1_w, lin1_b,
#              lin2_w, lin2_b, out
# ----------------------------------------------------------------------------
def gnn_packed_kernel(num_layers, x_ref, adj_ref, pool_ref, mask_ref, *refs):
    out_ref = refs[-1]
    wrefs = refs[:-1]

    adj = adj_ref[...]        # (N, N)   bf16 = A + (1+eps)*I
    mask = mask_ref[...]      # (CH, CH) f32 block-diag ones (per-channel sumsq)
    h = x_ref[...]            # (N, F_in) bf16 at layer 0, then (N, C*H) bf16

    # --- GIN message-passing layers, all channels packed in the lane dim -----
    for l in range(num_layers):
        w1 = wrefs[4 * l + 0][...]   # (d_in, C*H) bf16 (block-diag for l>0)
        b1 = wrefs[4 * l + 1][...]   # (1, C*H)    f32
        w2 = wrefs[4 * l + 2][...]   # (C*H, C*H)  bf16 block-diag
        b2 = wrefs[4 * l + 3][...]   # (1, C*H)    f32

        # (1+eps)*x_i + sum_{j in N(i)} x_j, self-loop folded into adj (eps=0).
        # Channel-independent: computed once for all channels.
        agg = jnp.dot(adj, h, preferred_element_type=jnp.float32)

        # GIN MLP: Linear -> ReLU -> Linear (bf16 MXU operands, f32 accumulate)
        z = jnp.maximum(
            jnp.dot(agg.astype(jnp.bfloat16), w1,
                    preferred_element_type=jnp.float32) + b1, 0.0)
        z = jnp.dot(z.astype(jnp.bfloat16), w2,
                    preferred_element_type=jnp.float32) + b2        # (N, C*H) f32

        # F.normalize(z, p=2, dim=1) per channel: block-diag ones mask gives
        # each lane the sum-of-squares of its own channel block (f32 MXU pass);
        # rsqrt hits the EUP slot; clamp on norm^2 (1e-24 == (1e-12)^2).
        sumsq = jnp.dot(z * z, mask, preferred_element_type=jnp.float32)
        z = z * lax.rsqrt(jnp.maximum(sumsq, 1e-24))

        # ReLU, back to bf16 for the next MXU pass
        h = jnp.maximum(z, 0.0).astype(jnp.bfloat16)

    # --- global_add_pool: (G, N) @ (N, C*H) -----------------------------------
    pooled = jnp.dot(pool_ref[...], h, preferred_element_type=jnp.float32)

    # --- classification heads: Linear -> ReLU -> (dropout: identity) -> Linear
    lin1_w = wrefs[-4][...]          # (C*H, C*H) bf16 block-diag
    lin1_b = wrefs[-3][...]          # (1, C*H)   f32
    lin2_w = wrefs[-2][...]          # (C*H, C)   bf16 block-diag of (H,1)
    lin2_b = wrefs[-1][...]          # (1, C)     f32

    p = jnp.maximum(
        jnp.dot(pooled.astype(jnp.bfloat16), lin1_w,
                preferred_element_type=jnp.float32) + lin1_b, 0.0)
    out = jnp.dot(p.astype(jnp.bfloat16), lin2_w,
                  preferred_element_type=jnp.float32) + lin2_b       # (G, C) f32

    # Natural (num_graphs, num_classes) output — no host-side transpose needed.
    out_ref[...] = out.astype(out_ref.dtype)


# ----------------------------------------------------------------------------
# One-time host-side preparation (hoisted OUT of the forward path)
# ----------------------------------------------------------------------------
def _block_diag(blocks):
    """Block-diagonal concat of equally-shaped 2-D blocks (one per channel)."""
    C = len(blocks)
    rows = []
    for c, m in enumerate(blocks):
        row = [m if i == c else jnp.zeros_like(m) for i in range(C)]
        rows.append(jnp.concatenate(row, axis=1))
    return jnp.concatenate(rows, axis=0)


def pack_params(params, *, num_layers, num_classes):
    """Pack per-channel weights into channel-in-lanes layout (done once)."""
    bf, f32 = jnp.bfloat16, jnp.float32
    packed = []
    for l in range(num_layers):
        w1, b1, w2, b2 = params["conv"][l]   # (C,d_in,H),(C,1,H),(C,H,H),(C,1,H)
        if l == 0:
            # h == x is shared across channels at layer 0 -> concat on lanes
            w1p = jnp.concatenate([w1[c] for c in range(num_classes)], axis=1)
        else:
            w1p = _block_diag([w1[c] for c in range(num_classes)])
        packed.append(w1p.astype(bf))
        packed.append(jnp.concatenate([b1[c] for c in range(num_classes)],
                                      axis=1).astype(f32))
        packed.append(_block_diag([w2[c] for c in range(num_classes)]).astype(bf))
        packed.append(jnp.concatenate([b2[c] for c in range(num_classes)],
                                      axis=1).astype(f32))
    packed.append(_block_diag(
        [params["lin1_w"][c] for c in range(num_classes)]).astype(bf))
    packed.append(jnp.concatenate(
        [params["lin1_b"][c] for c in range(num_classes)], axis=1).astype(f32))
    # lin2: per-channel (H, 1) -> (C*H, C) block-diagonal
    packed.append(_block_diag(
        [params["lin2_w"][c] for c in range(num_classes)]).astype(bf))
    packed.append(params["lin2_b"][:, 0, 0].reshape(1, num_classes).astype(f32))
    return packed


def prepare_inputs(x, adj, pool, *, num_classes, hidden, eps=0.0):
    """Fold the GIN self-loop into the adjacency, cast MXU operands to bf16,
    and build the per-channel normalization mask.  Done once per graph batch."""
    N = x.shape[0]
    adjI = (adj + (1.0 + eps) * jnp.eye(N, dtype=adj.dtype)).astype(jnp.bfloat16)
    x_bf = x.astype(jnp.bfloat16)
    pool_bf = pool.astype(jnp.bfloat16)
    # (C*H, C*H) block-diagonal ones: (z*z) @ mask -> per-channel sum of squares
    mask = jnp.kron(jnp.eye(num_classes, dtype=jnp.float32),
                    jnp.ones((hidden, hidden), jnp.float32))
    return x_bf, adjI, pool_bf, mask


# ----------------------------------------------------------------------------
# Jitted forward: single pallas_call, one grid step, everything VMEM-resident.
# ----------------------------------------------------------------------------
@functools.partial(jax.jit, static_argnames=("num_layers", "num_classes"))
def gnn_forward_pallas(x_bf, adjI, pool_bf, mask, packed, *,
                       num_layers, num_classes):
    N, F_in = x_bf.shape
    G = pool_bf.shape[0]
    CH = mask.shape[0]

    ins = [x_bf, adjI, pool_bf, mask, *packed]
    in_specs = [pl.BlockSpec(a.shape, lambda i, nd=a.ndim: (0,) * nd)
                for a in ins]

    # Advisory cost estimate for the XLA scheduler around the custom call.
    flops = 0
    d_in = F_in
    for _ in range(num_layers):
        flops += 2 * N * N * d_in          # adj @ h (all channels at once)
        flops += 2 * N * d_in * CH         # GIN MLP linear 1
        flops += 2 * N * CH * CH           # GIN MLP linear 2
        flops += 2 * N * CH * CH           # normalize mask matmul
        d_in = CH
    flops += 2 * G * N * CH + 2 * G * CH * CH + 2 * G * CH * num_classes
    transcendentals = num_layers * N * CH  # rsqrt per element per layer
    bytes_accessed = (sum(int(a.size) * a.dtype.itemsize for a in ins)
                      + G * num_classes * 4)

    out = pl.pallas_call(
        functools.partial(gnn_packed_kernel, num_layers),
        out_shape=jax.ShapeDtypeStruct((G, num_classes), jnp.float32),
        grid=(1,),
        in_specs=in_specs,
        out_specs=pl.BlockSpec((G, num_classes), lambda i: (0, 0)),
        # Single step: no "parallel" axis (splitting sub-µs work across TCs
        # only duplicates VMEM residency and adds scheduling overhead).
        compiler_params=pltpu.CompilerParams(
            dimension_semantics=("arbitrary",)),
        cost_estimate=pl.CostEstimate(
            flops=int(flops),
            transcendentals=int(transcendentals),
            bytes_accessed=int(bytes_accessed),
        ),
    )(*ins)

    node_weights = None  # use_ones=True path
    return out, node_weights


# ----------------------------------------------------------------------------
# Pure-JAX reference (per-channel math, same dtype boundaries) for correctness.
# NOTE: bf16 MXU operands deviate from PyTorch's fp32 GINConv; this reference
# validates kernel-vs-ref under the same dtype policy (intentional).
# ----------------------------------------------------------------------------
def gnn_forward_ref(x, adj, pool, params, *, num_layers, num_classes, eps=0.0):
    bf = jnp.bfloat16
    f32 = jnp.float32
    N = x.shape[0]
    adjI = (adj + (1.0 + eps) * jnp.eye(N, dtype=adj.dtype)).astype(bf)
    pool_bf = pool.astype(bf)
    outs = []
    for c in range(num_classes):
        h = x.astype(bf)
        for l in range(num_layers):
            w1, b1, w2, b2 = params["conv"][l]
            agg = jnp.dot(adjI, h, preferred_element_type=f32)
            z = jnp.maximum(
                jnp.dot(agg.astype(bf), w1[c].astype(bf),
                        preferred_element_type=f32) + b1[c], 0.0)
            z = jnp.dot(z.astype(bf), w2[c].astype(bf),
                        preferred_element_type=f32) + b2[c]
            sumsq = jnp.sum(z * z, axis=1, keepdims=True)
            z = z * lax.rsqrt(jnp.maximum(sumsq, 1e-24))
            h = jnp.maximum(z, 0.0).astype(bf)
        pooled = jnp.dot(pool_bf, h, preferred_element_type=f32)
        p = jnp.maximum(
            jnp.dot(pooled.astype(bf), params["lin1_w"][c].astype(bf),
                    preferred_element_type=f32) + params["lin1_b"][c], 0.0)
        out_c = jnp.dot(p.astype(bf), params["lin2_w"][c].astype(bf),
                        preferred_element_type=f32) + params["lin2_b"][c]
        outs.append(out_c)
    return jnp.concatenate(outs, axis=1)


# ----------------------------------------------------------------------------
# Deterministic parameter initialization (shapes from GNNModel.__init__)
# ----------------------------------------------------------------------------
def init_params(key, *, input_dim, hidden, num_layers, num_classes):
    params = {"conv": []}
    for l in range(num_layers):
        in_dim = input_dim if l == 0 else hidden
        key, k1, k2, k3, k4 = jax.random.split(key, 5)
        w1 = jax.random.normal(k1, (num_classes, in_dim, hidden), jnp.float32) * 0.2
        b1 = jax.random.normal(k2, (num_classes, 1, hidden), jnp.float32) * 0.1
        w2 = jax.random.normal(k3, (num_classes, hidden, hidden), jnp.float32) * 0.2
        b2 = jax.random.normal(k4, (num_classes, 1, hidden), jnp.float32) * 0.1
        params["conv"].append((w1, b1, w2, b2))
    key, k1, k2, k3, k4 = jax.random.split(key, 5)
    params["lin1_w"] = jax.random.normal(k1, (num_classes, hidden, hidden), jnp.float32) * 0.2
    params["lin1_b"] = jax.random.normal(k2, (num_classes, 1, hidden), jnp.float32) * 0.1
    params["lin2_w"] = jax.random.normal(k3, (num_classes, hidden, 1), jnp.float32) * 0.2
    params["lin2_b"] = jax.random.normal(k4, (num_classes, 1, 1), jnp.float32) * 0.1
    return params


if __name__ == "__main__":
    # Small, GNN-shaped problem: 4 graphs x 8 nodes, dual channel ("dual channel GIN")
    NUM_NODES = 32
    INPUT_DIM = 16
    HIDDEN = 32
    NUM_LAYERS = 2
    NUM_CLASSES = 2
    NUM_GRAPHS = 4
    NODES_PER_GRAPH = NUM_NODES // NUM_GRAPHS

    key = jax.random.PRNGKey(0)
    key, kx = jax.random.split(key)
    x = jax.random.normal(kx, (NUM_NODES, INPUT_DIM), jnp.float32)

    # Deterministic edge_index: bidirectional ring inside each graph.
    src, dst = [], []
    for g in range(NUM_GRAPHS):
        base = g * NODES_PER_GRAPH
        for i in range(NODES_PER_GRAPH):
            a = base + i
            b = base + (i + 1) % NODES_PER_GRAPH
            src += [a, b]
            dst += [b, a]
    edge_index = jnp.asarray(np.stack([src, dst], axis=0), jnp.int32)  # (2, E)
    batch = jnp.asarray(np.arange(NUM_NODES) // NODES_PER_GRAPH, jnp.int32)

    # Dense operators consumed by the kernel (glue, plain JAX):
    # adj[i, j] = #edges j->i (sum aggregation of incoming messages)
    adj = jnp.zeros((NUM_NODES, NUM_NODES), jnp.float32).at[
        edge_index[1], edge_index[0]
    ].add(1.0)
    # pool[g, n] = 1 if node n belongs to graph g  (global_add_pool)
    pool = (batch[None, :] == jnp.arange(NUM_GRAPHS)[:, None]).astype(jnp.float32)

    params = init_params(
        key, input_dim=INPUT_DIM, hidden=HIDDEN, num_layers=NUM_LAYERS,
        num_classes=NUM_CLASSES,
    )

    # One-time preprocessing (hoisted out of the forward path).
    x_bf, adjI, pool_bf, mask = prepare_inputs(
        x, adj, pool, num_classes=NUM_CLASSES, hidden=HIDDEN)
    packed = pack_params(params, num_layers=NUM_LAYERS, num_classes=NUM_CLASSES)

    logits, node_weights = gnn_forward_pallas(
        x_bf, adjI, pool_bf, mask, packed,
        num_layers=NUM_LAYERS, num_classes=NUM_CLASSES,
    )
    logits = jax.block_until_ready(logits)

    ref = gnn_forward_ref(
        x, adj, pool, params, num_layers=NUM_LAYERS, num_classes=NUM_CLASSES
    )
    np.testing.assert_allclose(np.asarray(logits), np.asarray(ref),
                               rtol=2e-3, atol=2e-3)
    assert logits.shape == (NUM_GRAPHS, NUM_CLASSES)
    assert node_weights is None  # use_ones=True path

    print("KERNEL_OK")
</pallas_src>

<mosaic_0001>
module attributes {stable_mosaic.version = 11 : i64} {
  func.func @gnn_packed_kernel(%arg0: i32, %arg1: memref<32x16xbf16, #tpu.memory_space<vmem>>, %arg2: memref<32x32xbf16, #tpu.memory_space<vmem>>, %arg3: memref<4x32xbf16, #tpu.memory_space<vmem>>, %arg4: memref<64x64xf32, #tpu.memory_space<vmem>>, %arg5: memref<16x64xbf16, #tpu.memory_space<vmem>>, %arg6: memref<1x64xf32, #tpu.memory_space<vmem>>, %arg7: memref<64x64xbf16, #tpu.memory_space<vmem>>, %arg8: memref<1x64xf32, #tpu.memory_space<vmem>>, %arg9: memref<64x64xbf16, #tpu.memory_space<vmem>>, %arg10: memref<1x64xf32, #tpu.memory_space<vmem>>, %arg11: memref<64x64xbf16, #tpu.memory_space<vmem>>, %arg12: memref<1x64xf32, #tpu.memory_space<vmem>>, %arg13: memref<64x64xbf16, #tpu.memory_space<vmem>>, %arg14: memref<1x64xf32, #tpu.memory_space<vmem>>, %arg15: memref<64x2xbf16, #tpu.memory_space<vmem>>, %arg16: memref<1x2xf32, #tpu.memory_space<vmem>>, %arg17: memref<4x2xf32, #tpu.memory_space<vmem>>) attributes {dimension_semantics = [#tpu.dimension_semantics<arbitrary>], iteration_bounds = array<i64: 1>, scalar_prefetch = 0 : i64, scratch_operands = 0 : i64, tpu.core_type = #tpu.core_type<tc>, window_params = [{pipeline_mode = #tpu.pipeline_mode<synchronous>, transform_indices = @transform_0, window_bounds = array<i64: 32, 16>}, {pipeline_mode = #tpu.pipeline_mode<synchronous>, transform_indices = @transform_1, window_bounds = array<i64: 32, 32>}, {pipeline_mode = #tpu.pipeline_mode<synchronous>, transform_indices = @transform_2, window_bounds = array<i64: 4, 32>}, {pipeline_mode = #tpu.pipeline_mode<synchronous>, transform_indices = @transform_3, window_bounds = array<i64: 64, 64>}, {pipeline_mode = #tpu.pipeline_mode<synchronous>, transform_indices = @transform_4, window_bounds = array<i64: 16, 64>}, {pipeline_mode = #tpu.pipeline_mode<synchronous>, transform_indices = @transform_5, window_bounds = array<i64: 1, 64>}, {pipeline_mode = #tpu.pipeline_mode<synchronous>, transform_indices = @transform_6, window_bounds = array<i64: 64, 64>}, {pipeline_mode = #tpu.pipeline_mode<synchronous>, transform_indices = @transform_7, window_bounds = array<i64: 1, 64>}, {pipeline_mode = #tpu.pipeline_mode<synchronous>, transform_indices = @transform_8, window_bounds = array<i64: 64, 64>}, {pipeline_mode = #tpu.pipeline_mode<synchronous>, transform_indices = @transform_9, window_bounds = array<i64: 1, 64>}, {pipeline_mode = #tpu.pipeline_mode<synchronous>, transform_indices = @transform_10, window_bounds = array<i64: 64, 64>}, {pipeline_mode = #tpu.pipeline_mode<synchronous>, transform_indices = @transform_11, window_bounds = array<i64: 1, 64>}, {pipeline_mode = #tpu.pipeline_mode<synchronous>, transform_indices = @transform_12, window_bounds = array<i64: 64, 64>}, {pipeline_mode = #tpu.pipeline_mode<synchronous>, transform_indices = @transform_13, window_bounds = array<i64: 1, 64>}, {pipeline_mode = #tpu.pipeline_mode<synchronous>, transform_indices = @transform_14, window_bounds = array<i64: 64, 2>}, {pipeline_mode = #tpu.pipeline_mode<synchronous>, transform_indices = @transform_15, window_bounds = array<i64: 1, 2>}, {pipeline_mode = #tpu.pipeline_mode<synchronous>, transform_indices = @transform_16, window_bounds = array<i64: 4, 2>}]} {
    %c0 = arith.constant 0 : index
    %c0_0 = arith.constant 0 : index
    %0 = vector.load %arg2[%c0, %c0_0] : memref<32x32xbf16, #tpu.memory_space<vmem>>, vector<32x32xbf16>
    %c0_1 = arith.constant 0 : index
    %c0_2 = arith.constant 0 : index
    %1 = vector.load %arg4[%c0_1, %c0_2] : memref<64x64xf32, #tpu.memory_space<vmem>>, vector<64x64xf32>
    %c0_3 = arith.constant 0 : index
    %c0_4 = arith.constant 0 : index
    %2 = vector.load %arg1[%c0_3, %c0_4] : memref<32x16xbf16, #tpu.memory_space<vmem>>, vector<32x16xbf16>
    %c0_5 = arith.constant 0 : index
    %c0_6 = arith.constant 0 : index
    %3 = vector.load %arg5[%c0_5, %c0_6] : memref<16x64xbf16, #tpu.memory_space<vmem>>, vector<16x64xbf16>
    %c0_7 = arith.constant 0 : index
    %c0_8 = arith.constant 0 : index
    %4 = vector.load %arg6[%c0_7, %c0_8] : memref<1x64xf32, #tpu.memory_space<vmem>>, vector<1x64xf32>
    %c0_9 = arith.constant 0 : index
    %c0_10 = arith.constant 0 : index
    %5 = vector.load %arg7[%c0_9, %c0_10] : memref<64x64xbf16, #tpu.memory_space<vmem>>, vector<64x64xbf16>
    %c0_11 = arith.constant 0 : index
    %c0_12 = arith.constant 0 : index
    %6 = vector.load %arg8[%c0_11, %c0_12] : memref<1x64xf32, #tpu.memory_space<vmem>>, vector<1x64xf32>
    %cst = arith.constant dense<0.000000e+00> : vector<32x16xf32>
    %7 = tpu.matmul %0, %2, %cst {dimension_numbers = #tpu.dot_dimension_numbers<[1], [0], [0], [1], [0, 0, 1, 1], [], []>} : vector<32x32xbf16>, vector<32x16xbf16>, vector<32x16xf32> -> vector<32x16xf32>
    %8 = arith.truncf %7 : vector<32x16xf32> to vector<32x16xbf16>
    %cst_13 = arith.constant dense<0.000000e+00> : vector<32x64xf32>
    %9 = tpu.matmul %8, %3, %cst_13 {dimension_numbers = #tpu.dot_dimension_numbers<[1], [0], [0], [1], [0, 0, 1, 1], [], []>} : vector<32x16xbf16>, vector<16x64xbf16>, vector<32x64xf32> -> vector<32x64xf32>
    %10 = vector.broadcast %4 : vector<1x64xf32> to vector<32x64xf32>
    %11 = arith.addf %9, %10 : vector<32x64xf32>
    %cst_14 = arith.constant 0.000000e+00 : f32
    %12 = vector.broadcast %cst_14 : f32 to vector<32x64xf32>
    %13 = arith.maximumf %11, %12 : vector<32x64xf32>
    %14 = arith.truncf %13 : vector<32x64xf32> to vector<32x64xbf16>
    %cst_15 = arith.constant dense<0.000000e+00> : vector<32x64xf32>
    %15 = tpu.matmul %14, %5, %cst_15 {dimension_numbers = #tpu.dot_dimension_numbers<[1], [0], [0], [1], [0, 0, 1, 1], [], []>} : vector<32x64xbf16>, vector<64x64xbf16>, vector<32x64xf32> -> vector<32x64xf32>
    %16 = vector.broadcast %6 : vector<1x64xf32> to vector<32x64xf32>
    %17 = arith.addf %15, %16 : vector<32x64xf32>
    %18 = arith.mulf %17, %17 : vector<32x64xf32>
    %cst_16 = arith.constant dense<0.000000e+00> : vector<32x64xf32>
    %19 = tpu.matmul %18, %1, %cst_16 {dimension_numbers = #tpu.dot_dimension_numbers<[1], [0], [0], [1], [0, 0, 1, 1], [], []>} : vector<32x64xf32>, vector<64x64xf32>, vector<32x64xf32> -> vector<32x64xf32>
    %cst_17 = arith.constant 1.000000e-24 : f32
    %20 = vector.broadcast %cst_17 : f32 to vector<32x64xf32>
    %21 = arith.maximumf %19, %20 : vector<32x64xf32>
    %22 = math.rsqrt %21 : vector<32x64xf32>
    %23 = arith.mulf %17, %22 : vector<32x64xf32>
    %cst_18 = arith.constant 0.000000e+00 : f32
    %24 = vector.broadcast %cst_18 : f32 to vector<32x64xf32>
    %25 = arith.maximumf %23, %24 : vector<32x64xf32>
    %26 = arith.truncf %25 : vector<32x64xf32> to vector<32x64xbf16>
    %c0_19 = arith.constant 0 : index
    %c0_20 = arith.constant 0 : index
    %27 = vector.load %arg9[%c0_19, %c0_20] : memref<64x64xbf16, #tpu.memory_space<vmem>>, vector<64x64xbf16>
    %c0_21 = arith.constant 0 : index
    %c0_22 = arith.constant 0 : index
    %28 = vector.load %arg10[%c0_21, %c0_22] : memref<1x64xf32, #tpu.memory_space<vmem>>, vector<1x64xf32>
    %c0_23 = arith.constant 0 : index
    %c0_24 = arith.constant 0 : index
    %29 = vector.load %arg11[%c0_23, %c0_24] : memref<64x64xbf16, #tpu.memory_space<vmem>>, vector<64x64xbf16>
    %c0_25 = arith.constant 0 : index
    %c0_26 = arith.constant 0 : index
    %30 = vector.load %arg12[%c0_25, %c0_26] : memref<1x64xf32, #tpu.memory_space<vmem>>, vector<1x64xf32>
    %cst_27 = arith.constant dense<0.000000e+00> : vector<32x64xf32>
    %31 = tpu.matmul %0, %26, %cst_27 {dimension_numbers = #tpu.dot_dimension_numbers<[1], [0], [0], [1], [0, 0, 1, 1], [], []>} : vector<32x32xbf16>, vector<32x64xbf16>, vector<32x64xf32> -> vector<32x64xf32>
    %32 = arith.truncf %31 : vector<32x64xf32> to vector<32x64xbf16>
    %cst_28 = arith.constant dense<0.000000e+00> : vector<32x64xf32>
    %33 = tpu.matmul %32, %27, %cst_28 {dimension_numbers = #tpu.dot_dimension_numbers<[1], [0], [0], [1], [0, 0, 1, 1], [], []>} : vector<32x64xbf16>, vector<64x64xbf16>, vector<32x64xf32> -> vector<32x64xf32>
    %34 = vector.broadcast %28 : vector<1x64xf32> to vector<32x64xf32>
    %35 = arith.addf %33, %34 : vector<32x64xf32>
    %cst_29 = arith.constant 0.000000e+00 : f32
    %36 = vector.broadcast %cst_29 : f32 to vector<32x64xf32>
    %37 = arith.maximumf %35, %36 : vector<32x64xf32>
    %38 = arith.truncf %37 : vector<32x64xf32> to vector<32x64xbf16>
    %cst_30 = arith.constant dense<0.000000e+00> : vector<32x64xf32>
    %39 = tpu.matmul %38, %29, %cst_30 {dimension_numbers = #tpu.dot_dimension_numbers<[1], [0], [0], [1], [0, 0, 1, 1], [], []>} : vector<32x64xbf16>, vector<64x64xbf16>, vector<32x64xf32> -> vector<32x64xf32>
    %40 = vector.broadcast %30 : vector<1x64xf32> to vector<32x64xf32>
    %41 = arith.addf %39, %40 : vector<32x64xf32>
    %42 = arith.mulf %41, %41 : vector<32x64xf32>
    %cst_31 = arith.constant dense<0.000000e+00> : vector<32x64xf32>
    %43 = tpu.matmul %42, %1, %cst_31 {dimension_numbers = #tpu.dot_dimension_numbers<[1], [0], [0], [1], [0, 0, 1, 1], [], []>} : vector<32x64xf32>, vector<64x64xf32>, vector<32x64xf32> -> vector<32x64xf32>
    %cst_32 = arith.constant 1.000000e-24 : f32
    %44 = vector.broadcast %cst_32 : f32 to vector<32x64xf32>
    %45 = arith.maximumf %43, %44 : vector<32x64xf32>
    %46 = math.rsqrt %45 : vector<32x64xf32>
    %47 = arith.mulf %41, %46 : vector<32x64xf32>
    %cst_33 = arith.constant 0.000000e+00 : f32
    %48 = vector.broadcast %cst_33 : f32 to vector<32x64xf32>
    %49 = arith.maximumf %47, %48 : vector<32x64xf32>
    %50 = arith.truncf %49 : vector<32x64xf32> to vector<32x64xbf16>
    %c0_34 = arith.constant 0 : index
    %c0_35 = arith.constant 0 : index
    %51 = vector.load %arg3[%c0_34, %c0_35] : memref<4x32xbf16, #tpu.memory_space<vmem>>, vector<4x32xbf16>
    %cst_36 = arith.constant dense<0.000000e+00> : vector<4x64xf32>
    %52 = tpu.matmul %51, %50, %cst_36 {dimension_numbers = #tpu.dot_dimension_numbers<[1], [0], [0], [1], [0, 0, 1, 1], [], []>} : vector<4x32xbf16>, vector<32x64xbf16>, vector<4x64xf32> -> vector<4x64xf32>
    %c0_37 = arith.constant 0 : index
    %c0_38 = arith.constant 0 : index
    %53 = vector.load %arg13[%c0_37, %c0_38] : memref<64x64xbf16, #tpu.memory_space<vmem>>, vector<64x64xbf16>
    %c0_39 = arith.constant 0 : index
    %c0_40 = arith.constant 0 : index
    %54 = vector.load %arg14[%c0_39, %c0_40] : memref<1x64xf32, #tpu.memory_space<vmem>>, vector<1x64xf32>
    %c0_41 = arith.constant 0 : index
    %c0_42 = arith.constant 0 : index
    %55 = vector.load %arg15[%c0_41, %c0_42] : memref<64x2xbf16, #tpu.memory_space<vmem>>, vector<64x2xbf16>
    %c0_43 = arith.constant 0 : index
    %c0_44 = arith.constant 0 : index
    %56 = vector.load %arg16[%c0_43, %c0_44] : memref<1x2xf32, #tpu.memory_space<vmem>>, vector<1x2xf32>
    %57 = arith.truncf %52 : vector<4x64xf32> to vector<4x64xbf16>
    %cst_45 = arith.constant dense<0.000000e+00> : vector<4x64xf32>
    %58 = tpu.matmul %57, %53, %cst_45 {dimension_numbers = #tpu.dot_dimension_numbers<[1], [0], [0], [1], [0, 0, 1, 1], [], []>} : vector<4x64xbf16>, vector<64x64xbf16>, vector<4x64xf32> -> vector<4x64xf32>
    %59 = vector.broadcast %54 : vector<1x64xf32> to vector<4x64xf32>
    %60 = arith.addf %58, %59 : vector<4x64xf32>
    %cst_46 = arith.constant 0.000000e+00 : f32
    %61 = vector.broadcast %cst_46 : f32 to vector<4x64xf32>
    %62 = arith.maximumf %60, %61 : vector<4x64xf32>
    %63 = arith.truncf %62 : vector<4x64xf32> to vector<4x64xbf16>
    %cst_47 = arith.constant dense<0.000000e+00> : vector<4x2xf32>
    %64 = tpu.matmul %63, %55, %cst_47 {dimension_numbers = #tpu.dot_dimension_numbers<[1], [0], [0], [1], [0, 0, 1, 1], [], []>} : vector<4x64xbf16>, vector<64x2xbf16>, vector<4x2xf32> -> vector<4x2xf32>
    %65 = vector.broadcast %56 : vector<1x2xf32> to vector<4x2xf32>
    %66 = arith.addf %64, %65 : vector<4x2xf32>
    %c0_48 = arith.constant 0 : index
    %c0_49 = arith.constant 0 : index
    %67 = vector.load %arg17[%c0_48, %c0_49] : memref<4x2xf32, #tpu.memory_space<vmem>>, vector<4x2xf32>
    tpu.vector_store %arg17[%c0_48, %c0_49], %66 {strides = array<i32>} : memref<4x2xf32, #tpu.memory_space<vmem>>, vector<4x2xf32>,
    return
  }
  func.func @transform_0(%arg0: i32) -> (i32, i32) {
    %c0_i32 = arith.constant 0 : i32
    %c0_i32_0 = arith.constant 0 : i32
    %c0_i32_1 = arith.constant 0 : i32
    return %c0_i32, %c0_i32_0 : i32, i32
  }
  func.func @transform_1(%arg0: i32) -> (i32, i32) {
    %c0_i32 = arith.constant 0 : i32
    %c0_i32_0 = arith.constant 0 : i32
    %c0_i32_1 = arith.constant 0 : i32
    return %c0_i32, %c0_i32_0 : i32, i32
  }
  func.func @transform_2(%arg0: i32) -> (i32, i32) {
    %c0_i32 = arith.constant 0 : i32
    %c0_i32_0 = arith.constant 0 : i32
    %c0_i32_1 = arith.constant 0 : i32
    return %c0_i32, %c0_i32_0 : i32, i32
  }
  func.func @transform_3(%arg0: i32) -> (i32, i32) {
    %c0_i32 = arith.constant 0 : i32
    %c0_i32_0 = arith.constant 0 : i32
    %c0_i32_1 = arith.constant 0 : i32
    return %c0_i32, %c0_i32_0 : i32, i32
  }
  func.func @transform_4(%arg0: i32) -> (i32, i32) {
    %c0_i32 = arith.constant 0 : i32
    %c0_i32_0 = arith.constant 0 : i32
    %c0_i32_1 = arith.constant 0 : i32
    return %c0_i32, %c0_i32_0 : i32, i32
  }
  func.func @transform_5(%arg0: i32) -> (i32, i32) {
    %c0_i32 = arith.constant 0 : i32
    %c0_i32_0 = arith.constant 0 : i32
    %c0_i32_1 = arith.constant 0 : i32
    return %c0_i32, %c0_i32_0 : i32, i32
  }
  func.func @transform_6(%arg0: i32) -> (i32, i32) {
    %c0_i32 = arith.constant 0 : i32
    %c0_i32_0 = arith.constant 0 : i32
    %c0_i32_1 = arith.constant 0 : i32
    return %c0_i32, %c0_i32_0 : i32, i32
  }
  func.func @transform_7(%arg0: i32) -> (i32, i32) {
    %c0_i32 = arith.constant 0 : i32
    %c0_i32_0 = arith.constant 0 : i32
    %c0_i32_1 = arith.constant 0 : i32
    return %c0_i32, %c0_i32_0 : i32, i32
  }
  func.func @transform_8(%arg0: i32) -> (i32, i32) {
    %c0_i32 = arith.constant 0 : i32
    %c0_i32_0 = arith.constant 0 : i32
    %c0_i32_1 = arith.constant 0 : i32
    return %c0_i32, %c0_i32_0 : i32, i32
  }
  func.func @transform_9(%arg0: i32) -> (i32, i32) {
    %c0_i32 = arith.constant 0 : i32
    %c0_i32_0 = arith.constant 0 : i32
    %c0_i32_1 = arith.constant 0 : i32
    return %c0_i32, %c0_i32_0 : i32, i32
  }
  func.func @transform_10(%arg0: i32) -> (i32, i32) {
    %c0_i32 = arith.constant 0 : i32
    %c0_i32_0 = arith.constant 0 : i32
    %c0_i32_1 = arith.constant 0 : i32
    return %c0_i32, %c0_i32_0 : i32, i32
  }
  func.func @transform_11(%arg0: i32) -> (i32, i32) {
    %c0_i32 = arith.constant 0 : i32
    %c0_i32_0 = arith.constant 0 : i32
    %c0_i32_1 = arith.constant 0 : i32
    return %c0_i32, %c0_i32_0 : i32, i32
  }
  func.func @transform_12(%arg0: i32) -> (i32, i32) {
    %c0_i32 = arith.constant 0 : i32
    %c0_i32_0 = arith.constant 0 : i32
    %c0_i32_1 = arith.constant 0 : i32
    return %c0_i32, %c0_i32_0 : i32, i32
  }
  func.func @transform_13(%arg0: i32) -> (i32, i32) {
    %c0_i32 = arith.constant 0 : i32
    %c0_i32_0 = arith.constant 0 : i32
    %c0_i32_1 = arith.constant 0 : i32
    return %c0_i32, %c0_i32_0 : i32, i32
  }
  func.func @transform_14(%arg0: i32) -> (i32, i32) {
    %c0_i32 = arith.constant 0 : i32
    %c0_i32_0 = arith.constant 0 : i32
    %c0_i32_1 = arith.constant 0 : i32
    return %c0_i32, %c0_i32_0 : i32, i32
  }
  func.func @transform_15(%arg0: i32) -> (i32, i32) {
    %c0_i32 = arith.constant 0 : i32
    %c0_i32_0 = arith.constant 0 : i32
    %c0_i32_1 = arith.constant 0 : i32
    return %c0_i32, %c0_i32_0 : i32, i32
  }
  func.func @transform_16(%arg0: i32) -> (i32, i32) {
    %c0_i32 = arith.constant 0 : i32
    %c0_i32_0 = arith.constant 0 : i32
    %c0_i32_1 = arith.constant 0 : i32
    return %c0_i32, %c0_i32_0 : i32, i32
  }
}

</mosaic_0001>

<llo_original>
// kernel: gnn_forward_pallas.1
$region0: #{gnn_forward_pallas.1}
  #allocation0 [shape = 'u32[]', space=smem, size = 0x4, offset = 0x4, fixed_abs, tag = 'smem constant byte address 0x4 - core index']
  #allocation1 [shape = 'u32[72,128]{1,0:T(1,128)}', space=vmem, size = 0x9000, scoped, tag = 'internal scratch']
  %s0 = inlined_call_operand.vmem [shape: bf16[32,16], index: 0, kind: input, shape index: {}]
  %s1 = inlined_call_operand.hbm [shape: bf16[32,32], index: 1, kind: input, shape index: {}]
  %s2 = inlined_call_operand.hbm [shape: bf16[4,32], index: 2, kind: input, shape index: {}]
  %s3 = inlined_call_operand.hbm [shape: f32[64,64], index: 3, kind: input, shape index: {}]
  %s4 = inlined_call_operand.hbm [shape: bf16[16,64], index: 4, kind: input, shape index: {}]
  %s5 = inlined_call_operand.hbm [shape: f32[1,64], index: 5, kind: input, shape index: {}]
  %s6 = inlined_call_operand.vmem [shape: bf16[64,64], index: 6, kind: input, shape index: {}]
  %s7 = inlined_call_operand.hbm [shape: f32[1,64], index: 7, kind: input, shape index: {}]
  %s8 = inlined_call_operand.vmem [shape: bf16[64,64], index: 8, kind: input, shape index: {}]
  %s9 = inlined_call_operand.hbm [shape: f32[1,64], index: 9, kind: input, shape index: {}]
  %s10 = inlined_call_operand.hbm [shape: bf16[64,64], index: 10, kind: input, shape index: {}]
  %s11 = inlined_call_operand.vmem [shape: f32[1,64], index: 11, kind: input, shape index: {}]
  %s12 = inlined_call_operand.hbm [shape: bf16[64,64], index: 12, kind: input, shape index: {}]
  %s13 = inlined_call_operand.vmem [shape: f32[1,64], index: 13, kind: input, shape index: {}]
  %s14 = inlined_call_operand.vmem [shape: bf16[64,2], index: 14, kind: input, shape index: {}]
  %s15 = inlined_call_operand.vmem [shape: f32[1,2], index: 15, kind: input, shape index: {}]
  %s16 = inlined_call_operand.vmem [shape: f32[4,2], index: 16, kind: output, shape index: {}]
  %s17 = sld [smem:[#allocation0]]
  $region110: #{gnn_forward_pallas.1} parent=0
    _
  %s19 = ssub.s32 1, %s17
  %s20 = scalar_select 0, %s19, %s17
  $region1: #{gnn_forward_pallas.1} parent=0
    #allocation2 [shape = 'u8[8192]{0}', space=vmem, size = 0x2000, scoped, tag = 'input window, operand 1, single buffered']
    #allocation3 [shape = 's32[1]{0}', space=sflag, size = 0x4, scoped, tag = 'scoped memory for gnn_forward_pallas.1']
    #allocation4 [shape = 'u8[1024]{0}', space=vmem, size = 0x400, scoped, tag = 'input window, operand 2, single buffered']
    #allocation5 [shape = 's32[1]{0}', space=sflag, size = 0x4, scoped, tag = 'scoped memory for gnn_forward_pallas.1']
    #allocation6 [shape = 'u8[32768]{0}', space=vmem, size = 0x8000, scoped, tag = 'input window, operand 3, single buffered']
    #allocation7 [shape = 'u8[4096]{0}', space=vmem, size = 0x1000, scoped, tag = 'input window, operand 4, single buffered']
    #allocation8 [shape = 's32[1]{0}', space=sflag, size = 0x4, scoped, tag = 'scoped memory for gnn_forward_pallas.1']
    #allocation9 [shape = 'u8[512]{0}', space=vmem, size = 0x400, scoped, tag = 'input window, operand 5, single buffered']
    #allocation10 [shape = 'u8[512]{0}', space=vmem, size = 0x400, scoped, tag = 'input window, operand 7, single buffered']
    #allocation11 [shape = 's32[1]{0}', space=sflag, size = 0x4, scoped, tag = 'scoped memory for gnn_forward_pallas.1']
    #allocation12 [shape = 'u8[512]{0}', space=vmem, size = 0x400, scoped, tag = 'input window, operand 9, single buffered']
    #allocation13 [shape = 'u8[16384]{0}', space=vmem, size = 0x4000, scoped, tag = 'input window, operand 10, single buffered']
    #allocation14 [shape = 's32[1]{0}', space=sflag, size = 0x4, scoped, tag = 'scoped memory for gnn_forward_pallas.1']
    #allocation15 [shape = 'u8[16384]{0}', space=vmem, size = 0x4000, scoped, tag = 'input window, operand 12, single buffered']
    %21 = vsyncpa [#allocation3], 0
    %22 = vsyncpa [#allocation5], 0
    %23 = vsyncpa [#allocation8], 0
    %24 = vsyncpa [#allocation11], 0
    %25 = vsyncpa [#allocation14], 0
    // Predicated region
    $region2: #{gnn_forward_pallas.1} parent=1 // pred_check
      _
    $region3: #{gnn_forward_pallas.1} parent=1 // pred_check_branch
      %27 = sbr.rel (0) target = $region5
    $region4: #{gnn_forward_pallas.1} parent=1 // pred_region
      _
    $region5: #{gnn_forward_pallas.1} parent=1 // pred_fallthru
      _
    // Predicated region
    $region6: #{gnn_forward_pallas.1} parent=1 // pred_check
      _
    $region7: #{gnn_forward_pallas.1} parent=1 // pred_check_branch
      %29 = sbr.rel (0) target = $region9
    $region8: #{gnn_forward_pallas.1} parent=1 // pred_region
      %31 = vsyncadd [#allocation3], 0
      %s32 = sshll.u32 %s1, 4
      %s33 = int_to_ptr.hbm [resolvable:$true] %s32
      %s34 = sshll.u32 [#allocation2], 4
      %s35 = int_to_ptr.vmem [resolvable:$true] %s34
      %40 = dma.hbm_to_vmem [thread:$0]  %s33, 256, %s35, [#allocation3], 64, 64, 4
    $region9: #{gnn_forward_pallas.1} parent=1 // pred_fallthru
      _
    // Predicated region
    $region10: #{gnn_forward_pallas.1} parent=1 // pred_check
      _
    $region11: #{gnn_forward_pallas.1} parent=1 // pred_check_branch
      %42 = sbr.rel (0) target = $region13
    $region12: #{gnn_forward_pallas.1} parent=1 // pred_region
      %44 = vsyncadd [#allocation5], 0
      %s46 = sshll.u32 %s2, 4
      %s47 = int_to_ptr.hbm [resolvable:$true] %s46
      %s48 = sshll.u32 [#allocation4], 4
      %s49 = int_to_ptr.vmem [resolvable:$true] %s48
      %51 = dma.hbm_to_vmem [thread:$0]  %s47, 32, %s49, [#allocation5]
    $region13: #{gnn_forward_pallas.1} parent=1 // pred_fallthru
      _
    // Predicated region
    $region14: #{gnn_forward_pallas.1} parent=1 // pred_check
      _
    $region15: #{gnn_forward_pallas.1} parent=1 // pred_check_branch
      %53 = sbr.rel (0) target = $region17
    $region16: #{gnn_forward_pallas.1} parent=1 // pred_region
      %55 = vsyncadd [#allocation5], 0
      %s56 = sshll.u32 %s3, 4
      %s57 = int_to_ptr.hbm [resolvable:$true] %s56
      %s58 = sshll.u32 [#allocation6], 4
      %s59 = int_to_ptr.vmem [resolvable:$true] %s58
      %64 = dma.hbm_to_vmem [thread:$0]  %s57, 1024, %s59, [#allocation5], 128, 128, 8
    $region17: #{gnn_forward_pallas.1} parent=1 // pred_fallthru
      _
    // Predicated region
    $region18: #{gnn_forward_pallas.1} parent=1 // pred_check
      _
    $region19: #{gnn_forward_pallas.1} parent=1 // pred_check_branch
      %66 = sbr.rel (0) target = $region21
    $region20: #{gnn_forward_pallas.1} parent=1 // pred_region
      %68 = vsyncadd [#allocation8], 0
      %s69 = sshll.u32 %s4, 4
      %s70 = int_to_ptr.hbm [resolvable:$true] %s69
      %s71 = sshll.u32 [#allocation7], 4
      %s72 = int_to_ptr.vmem [resolvable:$true] %s71
      %77 = dma.hbm_to_vmem [thread:$0]  %s70, 128, %s72, [#allocation8], 64, 64, 4
    $region21: #{gnn_forward_pallas.1} parent=1 // pred_fallthru
      _
    // Predicated region
    $region22: #{gnn_forward_pallas.1} parent=1 // pred_check
      _
    $region23: #{gnn_forward_pallas.1} parent=1 // pred_check_branch
      %79 = sbr.rel (0) target = $region25
    $region24: #{gnn_forward_pallas.1} parent=1 // pred_region
      %81 = vsyncadd [#allocation8], 0
      %s83 = sshll.u32 %s5, 4
      %s84 = int_to_ptr.hbm [resolvable:$true] %s83
      %s85 = sshll.u32 [#allocation9], 4
      %s86 = int_to_ptr.vmem [resolvable:$true] %s85
      %88 = dma.hbm_to_vmem [thread:$0]  %s84, 16, %s86, [#allocation8]
    $region25: #{gnn_forward_pallas.1} parent=1 // pred_fallthru
      _
    // Predicated region
    $region26: #{gnn_forward_pallas.1} parent=1 // pred_check
      _
    $region27: #{gnn_forward_pallas.1} parent=1 // pred_check_branch
      %90 = sbr.rel (0) target = $region29
    $region28: #{gnn_forward_pallas.1} parent=1 // pred_region
      _
    $region29: #{gnn_forward_pallas.1} parent=1 // pred_fallthru
      _
    // Predicated region
    $region30: #{gnn_forward_pallas.1} parent=1 // pred_check
      _
    $region31: #{gnn_forward_pallas.1} parent=1 // pred_check_branch
      %92 = sbr.rel (0) target = $region33
    $region32: #{gnn_forward_pallas.1} parent=1 // pred_region
      %94 = vsyncadd [#allocation11], 0
      %s96 = sshll.u32 %s7, 4
      %s97 = int_to_ptr.hbm [resolvable:$true] %s96
      %s98 = sshll.u32 [#allocation10], 4
      %s99 = int_to_ptr.vmem [resolvable:$true] %s98
      %101 = dma.hbm_to_vmem [thread:$0]  %s97, 16, %s99, [#allocation11]
    $region33: #{gnn_forward_pallas.1} parent=1 // pred_fallthru
      _
    // Predicated region
    $region34: #{gnn_forward_pallas.1} parent=1 // pred_check
      _
    $region35: #{gnn_forward_pallas.1} parent=1 // pred_check_branch
      %103 = sbr.rel (0) target = $region37
    $region36: #{gnn_forward_pallas.1} parent=1 // pred_region
      _
    $region37: #{gnn_forward_pallas.1} parent=1 // pred_fallthru
      _
    // Predicated region
    $region38: #{gnn_forward_pallas.1} parent=1 // pred_check
      _
    $region39: #{gnn_forward_pallas.1} parent=1 // pred_check_branch
      %105 = sbr.rel (0) target = $region41
    $region40: #{gnn_forward_pallas.1} parent=1 // pred_region
      %107 = vsyncadd [#allocation11], 0
      %s109 = sshll.u32 %s9, 4
      %s110 = int_to_ptr.hbm [resolvable:$true] %s109
      %s111 = sshll.u32 [#allocation12], 4
      %s112 = int_to_ptr.vmem [resolvable:$true] %s111
      %114 = dma.hbm_to_vmem [thread:$0]  %s110, 16, %s112, [#allocation11]
    $region41: #{gnn_forward_pallas.1} parent=1 // pred_fallthru
      _
    // Predicated region
    $region42: #{gnn_forward_pallas.1} parent=1 // pred_check
      _
    $region43: #{gnn_forward_pallas.1} parent=1 // pred_check_branch
      %116 = sbr.rel (0) target = $region45
    $region44: #{gnn_forward_pallas.1} parent=1 // pred_region
      %118 = vsyncadd [#allocation14], 0
      %s119 = sshll.u32 %s10, 4
      %s120 = int_to_ptr.hbm [resolvable:$true] %s119
      %s121 = sshll.u32 [#allocation13], 4
      %s122 = int_to_ptr.vmem [resolvable:$true] %s121
      %127 = dma.hbm_to_vmem [thread:$0]  %s120, 512, %s122, [#allocation14], 64, 64, 4
    $region45: #{gnn_forward_pallas.1} parent=1 // pred_fallthru
      _
    // Predicated region
    $region46: #{gnn_forward_pallas.1} parent=1 // pred_check
      _
    $region47: #{gnn_forward_pallas.1} parent=1 // pred_check_branch
      %129 = sbr.rel (0) target = $region49
    $region48: #{gnn_forward_pallas.1} parent=1 // pred_region
      _
    $region49: #{gnn_forward_pallas.1} parent=1 // pred_fallthru
      _
    // Predicated region
    $region50: #{gnn_forward_pallas.1} parent=1 // pred_check
      _
    $region51: #{gnn_forward_pallas.1} parent=1 // pred_check_branch
      %131 = sbr.rel (0) target = $region53
    $region52: #{gnn_forward_pallas.1} parent=1 // pred_region
      %133 = vsyncadd [#allocation14], 0
      %s134 = sshll.u32 %s12, 4
      %s135 = int_to_ptr.hbm [resolvable:$true] %s134
      %s136 = sshll.u32 [#allocation15], 4
      %s137 = int_to_ptr.vmem [resolvable:$true] %s136
      %142 = dma.hbm_to_vmem [thread:$0]  %s135, 512, %s137, [#allocation14], 64, 64, 4
    $region53: #{gnn_forward_pallas.1} parent=1 // pred_fallthru
      _
    // Predicated region
    $region54: #{gnn_forward_pallas.1} parent=1 // pred_check
      _
    $region55: #{gnn_forward_pallas.1} parent=1 // pred_check_branch
      %144 = sbr.rel (0) target = $region57
    $region56: #{gnn_forward_pallas.1} parent=1 // pred_region
      _
    $region57: #{gnn_forward_pallas.1} parent=1 // pred_fallthru
      _
    // Predicated region
    $region58: #{gnn_forward_pallas.1} parent=1 // pred_check
      _
    $region59: #{gnn_forward_pallas.1} parent=1 // pred_check_branch
      %146 = sbr.rel (0) target = $region61
    $region60: #{gnn_forward_pallas.1} parent=1 // pred_region
      _
    $region61: #{gnn_forward_pallas.1} parent=1 // pred_fallthru
      _
    // Predicated region
    $region62: #{gnn_forward_pallas.1} parent=1 // pred_check
      _
    $region63: #{gnn_forward_pallas.1} parent=1 // pred_check_branch
      %148 = sbr.rel (0) target = $region65
    $region64: #{gnn_forward_pallas.1} parent=1 // pred_region
      _
    $region65: #{gnn_forward_pallas.1} parent=1 // pred_fallthru
      _
    // Predicated region
    $region66: #{gnn_forward_pallas.1} parent=1 // pred_check
      _
    $region67: #{gnn_forward_pallas.1} parent=1 // pred_check_branch
      %150 = sbr.rel (0) target = $region69
    $region68: #{gnn_forward_pallas.1} parent=1 // pred_region
      %152 = dma.done [#allocation3], 256
    $region69: #{gnn_forward_pallas.1} parent=1 // pred_fallthru
      _
    // Predicated region
    $region70: #{gnn_forward_pallas.1} parent=1 // pred_check
      _
    $region71: #{gnn_forward_pallas.1} parent=1 // pred_check_branch
      %154 = sbr.rel (0) target = $region73
    $region72: #{gnn_forward_pallas.1} parent=1 // pred_region
      %156 = dma.done [#allocation5], 32
    $region73: #{gnn_forward_pallas.1} parent=1 // pred_fallthru
      _
    // Predicated region
    $region74: #{gnn_forward_pallas.1} parent=1 // pred_check
      _
    $region75: #{gnn_forward_pallas.1} parent=1 // pred_check_branch
      %158 = sbr.rel (0) target = $region77
    $region76: #{gnn_forward_pallas.1} parent=1 // pred_region
      %160 = dma.done [#allocation5], 1024
    $region77: #{gnn_forward_pallas.1} parent=1 // pred_fallthru
      _
    // Predicated region
    $region78: #{gnn_forward_pallas.1} parent=1 // pred_check
      _
    $region79: #{gnn_forward_pallas.1} parent=1 // pred_check_branch
      %162 = sbr.rel (0) target = $region81
    $region80: #{gnn_forward_pallas.1} parent=1 // pred_region
      %164 = dma.done [#allocation8], 128
    $region81: #{gnn_forward_pallas.1} parent=1 // pred_fallthru
      _
    // Predicated region
    $region82: #{gnn_forward_pallas.1} parent=1 // pred_check
      _
    $region83: #{gnn_forward_pallas.1} parent=1 // pred_check_branch
      %166 = sbr.rel (0) target = $region85
    $region84: #{gnn_forward_pallas.1} parent=1 // pred_region
      %168 = dma.done [#allocation8], 16
    $region85: #{gnn_forward_pallas.1} parent=1 // pred_fallthru
      _
    // Predicated region
    $region86: #{gnn_forward_pallas.1} parent=1 // pred_check
      _
    $region87: #{gnn_forward_pallas.1} parent=1 // pred_check_branch
      %170 = sbr.rel (0) target = $region89
    $region88: #{gnn_forward_pallas.1} parent=1 // pred_region
      %172 = dma.done [#allocation11], 16
    $region89: #{gnn_forward_pallas.1} parent=1 // pred_fallthru
      _
    // Predicated region
    $region90: #{gnn_forward_pallas.1} parent=1 // pred_check
      _
    $region91: #{gnn_forward_pallas.1} parent=1 // pred_check_branch
      %174 = sbr.rel (0) target = $region93
    $region92: #{gnn_forward_pallas.1} parent=1 // pred_region
      %176 = dma.done [#allocation11], 16
    $region93: #{gnn_forward_pallas.1} parent=1 // pred_fallthru
      _
    // Predicated region
    $region94: #{gnn_forward_pallas.1} parent=1 // pred_check
      _
    $region95: #{gnn_forward_pallas.1} parent=1 // pred_check_branch
      %178 = sbr.rel (0) target = $region97
    $region96: #{gnn_forward_pallas.1} parent=1 // pred_region
      %180 = dma.done [#allocation14], 512
    $region97: #{gnn_forward_pallas.1} parent=1 // pred_fallthru
      _
    // Predicated region
    $region98: #{gnn_forward_pallas.1} parent=1 // pred_check
      _
    $region99: #{gnn_forward_pallas.1} parent=1 // pred_check_branch
      %182 = sbr.rel (0) target = $region101
    $region100: #{gnn_forward_pallas.1} parent=1 // pred_region
      %184 = dma.done [#allocation14], 512
    $region101: #{gnn_forward_pallas.1} parent=1 // pred_fallthru
      _
    %v186 = vld [vmem:[#allocation2] sm:$0xf]
    %v187 = vld [vmem:[#allocation2 + $0x4] sm:$0xf]
    %v188 = vld [vmem:[#allocation2 + $0x8] sm:$0xf]
    %v189 = vld [vmem:[#allocation2 + $0xc] sm:$0xf]
    %v190 = vld [vmem:[#allocation6] sm:$0xff]
    %v191 = vld [vmem:[#allocation6 + $0x8] sm:$0xff]
    %v192 = vld [vmem:[#allocation6 + $0x10] sm:$0xff]
    %v193 = vld [vmem:[#allocation6 + $0x18] sm:$0xff]
    %v194 = vld [vmem:[#allocation6 + $0x20] sm:$0xff]
    %v195 = vld [vmem:[#allocation6 + $0x28] sm:$0xff]
    %v196 = vld [vmem:[#allocation6 + $0x30] sm:$0xff]
    %v197 = vld [vmem:[#allocation6 + $0x38] sm:$0xff]
    %v198 = vld [vmem:[%s0] sm:$0xf]
    %v199 = vld [vmem:[%s0 + $0x4] sm:$0xf]
    %v200 = vld [vmem:[%s0 + $0x8] sm:$0xf]
    %v201 = vld [vmem:[%s0 + $0xc] sm:$0xf]
    %v202 = vld [vmem:[#allocation7] sm:$0xf]
    %v203 = vld [vmem:[#allocation7 + $0x4] sm:$0xf]
    %v204 = vld [vmem:[#allocation9] sm:$0x1]
    %v205 = vld [vmem:[%s6] sm:$0xf]
    %v206 = vld [vmem:[%s6 + $0x4] sm:$0xf]
    %v207 = vld [vmem:[%s6 + $0x8] sm:$0xf]
    %v208 = vld [vmem:[%s6 + $0xc] sm:$0xf]
    %v209 = vld [vmem:[%s6 + $0x10] sm:$0xf]
    %v210 = vld [vmem:[%s6 + $0x14] sm:$0xf]
    %v211 = vld [vmem:[%s6 + $0x18] sm:$0xf]
    %v212 = vld [vmem:[%s6 + $0x1c] sm:$0xf]
    %v213 = vld [vmem:[#allocation10] sm:$0x1]
    %v218 = vunpack.c.l.b16 %v186
    %v219 = vunpack.c.l.b16 %v187
    %v220 = vunpack.c.l.b16 %v188
    %v221 = vunpack.c.l.b16 %v189
    %v222 = vpack.c.b16 %v219, %v218
    %v223 = vpack.c.b16 %v221, %v220
    %v228 = vunpack.c.l.b16 %v198
    %v229 = vunpack.c.l.b16 %v199
    %v230 = vunpack.c.l.b16 %v200
    %v231 = vunpack.c.l.b16 %v201
    %v232 = vpack.c.b16 %v229, %v228
    %v233 = vpack.c.b16 %v231, %v230
    %vm236 = vcmask 261120
    %v238 = vsel %vm236, %v222, 0
    %v241 = vsel %vm236, %v223, 0
    %243 = vmatpush.bf16.msra.mxu0 0
    %244 = vmatpush.bf16.msra.mxu0 0
    %245 = vmatpush.bf16.msra.mxu0 0
    %246 = vmatpush.bf16.msra.mxu0 0
    %247 = vmatpush.bf16.msra.mxu0 0
    %248 = vmatpush.bf16.msra.mxu0 0
    %249 = vmatpush.bf16.msra.mxu0 %v233
    %250 = vmatpush.bf16.msra.mxu0 %v232
    %251 = vmatmul.bf16.gmra.mxu0 %v238
    %v252 = vpop.f32.mrf.mxu0
    %v253 = vadd.f32 0.0, %v252
    %v254 = vpop.f32.mrf.mxu0
    %v255 = vadd.f32 0.0, %v254
    %256 = vmatmul.bf16.gmra.mxu0 %v241
    %v257 = vpop.f32.mrf.mxu0
    %v258 = vadd.f32 0.0, %v257
    %v259 = vpop.f32.mrf.mxu0
    %v260 = vadd.f32 0.0, %v259
    %261 = vdwg.mxu0
    %v262 = vpack.c.bf16 %v255, %v253
    %v263 = vpack.c.bf16 %v260, %v258
    %v265 = vperm.slane %v204, 0
    %v269 = vunpack.c.l.b16 %v202
    %v270 = vunpack.c.l.b16 %v203
    %v271 = vpack.c.b16 %v270, %v269
    %vm273 = vcmask 130048
    %v275 = vsel %vm273, %v262, 0
    %v278 = vsel %vm273, %v263, 0
    %280 = vmatpush.bf16.msra.mxu0 0
    %281 = vmatpush.bf16.msra.mxu0 0
    %282 = vmatpush.bf16.msra.mxu0 0
    %283 = vmatpush.bf16.msra.mxu0 0
    %284 = vmatpush.bf16.msra.mxu0 0
    %285 = vmatpush.bf16.msra.mxu0 0
    %286 = vmatpush.bf16.msra.mxu0 0
    %287 = vmatpush.bf16.msra.mxu0 %v271
    %288 = vmatmul.bf16.gmra.mxu0 %v275
    %v289 = vpop.f32.mrf.mxu0
    %v290 = vadd.f32 %v265, %v289
    %v291 = vpop.f32.mrf.mxu0
    %v292 = vadd.f32 %v265, %v291
    %293 = vmatmul.bf16.gmra.mxu0 %v278
    %v294 = vpop.f32.mrf.mxu0
    %v295 = vadd.f32 %v265, %v294
    %v296 = vpop.f32.mrf.mxu0
    %v297 = vadd.f32 %v265, %v296
    %298 = vdwg.mxu0
    %v299 = vmax.f32 %v290, 0.0
    %v300 = vmax.f32 %v292, 0.0
    %v301 = vmax.f32 %v295, 0.0
    %v302 = vmax.f32 %v297, 0.0
    %v303 = vpack.c.bf16 %v300, %v299
    %v304 = vpack.c.bf16 %v302, %v301
    %v306 = vperm.slane %v213, 0
    %v316 = vunpack.c.l.b16 %v205
    %v317 = vunpack.c.l.b16 %v206
    %v318 = vunpack.c.l.b16 %v207
    %v319 = vunpack.c.l.b16 %v208
    %v320 = vunpack.c.l.b16 %v209
    %v321 = vunpack.c.l.b16 %v210
    %v322 = vunpack.c.l.b16 %v211
    %v323 = vunpack.c.l.b16 %v212
    %v324 = vpack.c.b16 %v317, %v316
    %v325 = vpack.c.b16 %v319, %v318
    %v326 = vpack.c.b16 %v321, %v320
    %v327 = vpack.c.b16 %v323, %v322
    %vm332 = vcmask 523264
    %v334 = vsel %vm332, %v303, 0
    %v337 = vsel %vm332, %v304, 0
    %339 = vmatpush.bf16.msra.mxu0 0
    %340 = vmatpush.bf16.msra.mxu0 0
    %341 = vmatpush.bf16.msra.mxu0 0
    %342 = vmatpush.bf16.msra.mxu0 0
    %343 = vmatpush.bf16.msra.mxu0 %v327
    %344 = vmatpush.bf16.msra.mxu0 %v326
    %345 = vmatpush.bf16.msra.mxu0 %v325
    %346 = vmatpush.bf16.msra.mxu0 %v324
    %347 = vmatmul.bf16.gmra.mxu0 %v334
    %v348 = vpop.f32.mrf.mxu0
    %v349 = vadd.f32 %v306, %v348
    %v350 = vpop.f32.mrf.mxu0
    %v351 = vadd.f32 %v306, %v350
    %352 = vmatmul.bf16.gmra.mxu0 %v337
    %v353 = vpop.f32.mrf.mxu0
    %v354 = vadd.f32 %v306, %v353
    %v355 = vpop.f32.mrf.mxu0
    %v356 = vadd.f32 %v306, %v355
    %357 = vdwg.mxu0
    %v358 = vmul.f32 %v349, %v349
    %v359 = vmul.f32 %v351, %v351
    %v360 = vmul.f32 %v354, %v354
    %v361 = vmul.f32 %v356, %v356
    %v363 = vsel %vm332, %v358, 0
    %v366 = vsel %vm332, %v359, 0
    %v369 = vsel %vm332, %v360, 0
    %v372 = vsel %vm332, %v361, 0
    %374 = vmatpush.msra.mxu0 0.0
    %375 = vmatpush.msra.mxu0 0.0
    %376 = vmatpush.msra.mxu0 0.0
    %377 = vmatpush.msra.mxu0 0.0
    %378 = vmatpush.msra.mxu0 0.0
    %379 = vmatpush.msra.mxu0 0.0
    %380 = vmatpush.msra.mxu0 0.0
    %381 = vmatpush.msra.mxu0 0.0
    %382 = vmatpush.msra.mxu0 %v197
    %383 = vmatpush.msra.mxu0 %v196
    %384 = vmatpush.msra.mxu0 %v195
    %385 = vmatpush.msra.mxu0 %v194
    %386 = vmatpush.msra.mxu0 %v193
    %387 = vmatpush.msra.mxu0 %v192
    %388 = vmatpush.msra.mxu0 %v191
    %389 = vmatpush.msra.mxu0 %v190
    %390 = vmatmul.f32.gmra.mxu0 %v363
    %v391 = vpop.f32.mrf.mxu0
    %v392 = vadd.f32 0.0, %v391
    %393 = vmatmul.f32.gmra.mxu0 %v366
    %v394 = vpop.f32.mrf.mxu0
    %v395 = vadd.f32 0.0, %v394
    %396 = vmatmul.f32.gmra.mxu0 %v369
    %v397 = vpop.f32.mrf.mxu0
    %v398 = vadd.f32 0.0, %v397
    %399 = vmatmul.f32.gmra.mxu0 %v372
    %v400 = vpop.f32.mrf.mxu0
    %v401 = vadd.f32 0.0, %v400
    %402 = vdwg.mxu0
    %v403 = vmax.f32 %v392, 1e-24
    %v404 = vmax.f32 %v395, 1e-24
    %v405 = vmax.f32 %v398, 1e-24
    %v406 = vmax.f32 %v401, 1e-24
    %v407 = vrsqrt.pop %v403
    %v408 = vmul.f32 %v407, %v403
    %v409 = vmul.f32 %v408, %v407
    %v410 = vmul.f32 0.5, %v409
    %v411 = vsub.f32 1.5, %v410
    %v412 = vmul.f32 %v407, %v411
    %vm413 = vweird.f32 %v403
    %vm414 = vweird.f32 %v407
    %vm415 = vmor %vm413, %vm414
    %v416 = vsel %vm415, %v407, %v412
    %v417 = vrsqrt.pop %v404
    %v418 = vmul.f32 %v417, %v404
    %v419 = vmul.f32 %v418, %v417
    %v420 = vmul.f32 0.5, %v419
    %v421 = vsub.f32 1.5, %v420
    %v422 = vmul.f32 %v417, %v421
    %vm423 = vweird.f32 %v404
    %vm424 = vweird.f32 %v417
    %vm425 = vmor %vm423, %vm424
    %v426 = vsel %vm425, %v417, %v422
    %v427 = vrsqrt.pop %v405
    %v428 = vmul.f32 %v427, %v405
    %v429 = vmul.f32 %v428, %v427
    %v430 = vmul.f32 0.5, %v429
    %v431 = vsub.f32 1.5, %v430
    %v432 = vmul.f32 %v427, %v431
    %vm433 = vweird.f32 %v405
    %vm434 = vweird.f32 %v427
    %vm435 = vmor %vm433, %vm434
    %v436 = vsel %vm435, %v427, %v432
    %v437 = vrsqrt.pop %v406
    %v438 = vmul.f32 %v437, %v406
    %v439 = vmul.f32 %v438, %v437
    %v440 = vmul.f32 0.5, %v439
    %v441 = vsub.f32 1.5, %v440
    %v442 = vmul.f32 %v437, %v441
    %vm443 = vweird.f32 %v406
    %vm444 = vweird.f32 %v437
    %vm445 = vmor %vm443, %vm444
    %v446 = vsel %vm445, %v437, %v442
    %v447 = vmul.f32 %v349, %v416
    %v448 = vmul.f32 %v351, %v426
    %v449 = vmul.f32 %v354, %v436
    %v450 = vmul.f32 %v356, %v446
    %v451 = vmax.f32 %v447, 0.0
    %v452 = vmax.f32 %v448, 0.0
    %v453 = vmax.f32 %v449, 0.0
    %v454 = vmax.f32 %v450, 0.0
    %v455 = vpack.c.bf16 %v452, %v451
    %v456 = vpack.c.bf16 %v454, %v453
    %v457 = vld [vmem:[%s8] sm:$0xf]
    %v458 = vld [vmem:[%s8 + $0x4] sm:$0xf]
    %v459 = vld [vmem:[%s8 + $0x8] sm:$0xf]
    %v460 = vld [vmem:[%s8 + $0xc] sm:$0xf]
    %v461 = vld [vmem:[%s8 + $0x10] sm:$0xf]
    %v462 = vld [vmem:[%s8 + $0x14] sm:$0xf]
    %v463 = vld [vmem:[%s8 + $0x18] sm:$0xf]
    %v464 = vld [vmem:[%s8 + $0x1c] sm:$0xf]
    %v465 = vld [vmem:[#allocation12] sm:$0x1]
    %v466 = vld [vmem:[#allocation13] sm:$0xf]
    %v467 = vld [vmem:[#allocation13 + $0x4] sm:$0xf]
    %v468 = vld [vmem:[#allocation13 + $0x8] sm:$0xf]
    %v469 = vld [vmem:[#allocation13 + $0xc] sm:$0xf]
    %v470 = vld [vmem:[#allocation13 + $0x10] sm:$0xf]
    %v471 = vld [vmem:[#allocation13 + $0x14] sm:$0xf]
    %v472 = vld [vmem:[#allocation13 + $0x18] sm:$0xf]
    %v473 = vld [vmem:[#allocation13 + $0x1c] sm:$0xf]
    %v474 = vld [vmem:[%s11] sm:$0x1]
    %475 = vmatpush.bf16.msra.mxu0 0
    %476 = vmatpush.bf16.msra.mxu0 0
    %477 = vmatpush.bf16.msra.mxu0 0
    %478 = vmatpush.bf16.msra.mxu0 0
    %479 = vmatpush.bf16.msra.mxu0 0
    %480 = vmatpush.bf16.msra.mxu0 0
    %481 = vmatpush.bf16.msra.mxu0 %v456
    %482 = vmatpush.bf16.msra.mxu0 %v455
    %483 = vmatmul.bf16.gmra.mxu0 %v238
    %v484 = vpop.f32.mrf.mxu0
    %v485 = vadd.f32 0.0, %v484
    %v486 = vpop.f32.mrf.mxu0
    %v487 = vadd.f32 0.0, %v486
    %488 = vmatmul.bf16.gmra.mxu0 %v241
    %v489 = vpop.f32.mrf.mxu0
    %v490 = vadd.f32 0.0, %v489
    %v491 = vpop.f32.mrf.mxu0
    %v492 = vadd.f32 0.0, %v491
    %493 = vdwg.mxu0
    %v494 = vpack.c.bf16 %v487, %v485
    %v495 = vpack.c.bf16 %v492, %v490
    %v497 = vperm.slane %v465, 0
    %v507 = vunpack.c.l.b16 %v457
    %v508 = vunpack.c.l.b16 %v458
    %v509 = vunpack.c.l.b16 %v459
    %v510 = vunpack.c.l.b16 %v460
    %v511 = vunpack.c.l.b16 %v461
    %v512 = vunpack.c.l.b16 %v462
    %v513 = vunpack.c.l.b16 %v463
    %v514 = vunpack.c.l.b16 %v464
    %v515 = vpack.c.b16 %v508, %v507
    %v516 = vpack.c.b16 %v510, %v509
    %v517 = vpack.c.b16 %v512, %v511
    %v518 = vpack.c.b16 %v514, %v513
    %v524 = vsel %vm332, %v494, 0
    %v527 = vsel %vm332, %v495, 0
    %529 = vmatpush.bf16.msra.mxu0 0
    %530 = vmatpush.bf16.msra.mxu0 0
    %531 = vmatpush.bf16.msra.mxu0 0
    %532 = vmatpush.bf16.msra.mxu0 0
    %533 = vmatpush.bf16.msra.mxu0 %v518
    %534 = vmatpush.bf16.msra.mxu0 %v517
    %535 = vmatpush.bf16.msra.mxu0 %v516
    %536 = vmatpush.bf16.msra.mxu0 %v515
    %537 = vmatmul.bf16.gmra.mxu0 %v524
    %v538 = vpop.f32.mrf.mxu0
    %v539 = vadd.f32 %v497, %v538
    %v540 = vpop.f32.mrf.mxu0
    %v541 = vadd.f32 %v497, %v540
    %542 = vmatmul.bf16.gmra.mxu0 %v527
    %v543 = vpop.f32.mrf.mxu0
    %v544 = vadd.f32 %v497, %v543
    %v545 = vpop.f32.mrf.mxu0
    %v546 = vadd.f32 %v497, %v545
    %547 = vdwg.mxu0
    %v548 = vmax.f32 %v539, 0.0
    %v549 = vmax.f32 %v541, 0.0
    %v550 = vmax.f32 %v544, 0.0
    %v551 = vmax.f32 %v546, 0.0
    %v552 = vpack.c.bf16 %v549, %v548
    %v553 = vpack.c.bf16 %v551, %v550
    %v555 = vperm.slane %v474, 0
    %v565 = vunpack.c.l.b16 %v466
    %v566 = vunpack.c.l.b16 %v467
    %v567 = vunpack.c.l.b16 %v468
    %v568 = vunpack.c.l.b16 %v469
    %v569 = vunpack.c.l.b16 %v470
    %v570 = vunpack.c.l.b16 %v471
    %v571 = vunpack.c.l.b16 %v472
    %v572 = vunpack.c.l.b16 %v473
    %v573 = vpack.c.b16 %v566, %v565
    %v574 = vpack.c.b16 %v568, %v567
    %v575 = vpack.c.b16 %v570, %v569
    %v576 = vpack.c.b16 %v572, %v571
    %v582 = vsel %vm332, %v552, 0
    %v585 = vsel %vm332, %v553, 0
    %587 = vmatpush.bf16.msra.mxu0 0
    %588 = vmatpush.bf16.msra.mxu0 0
    %589 = vmatpush.bf16.msra.mxu0 0
    %590 = vmatpush.bf16.msra.mxu0 0
    %591 = vmatpush.bf16.msra.mxu0 %v576
    %592 = vmatpush.bf16.msra.mxu0 %v575
    %593 = vmatpush.bf16.msra.mxu0 %v574
    %594 = vmatpush.bf16.msra.mxu0 %v573
    %595 = vmatmul.bf16.gmra.mxu0 %v582
    %v596 = vpop.f32.mrf.mxu0
    %v597 = vadd.f32 %v555, %v596
    %v598 = vpop.f32.mrf.mxu0
    %v599 = vadd.f32 %v555, %v598
    %600 = vmatmul.bf16.gmra.mxu0 %v585
    %v601 = vpop.f32.mrf.mxu0
    %v602 = vadd.f32 %v555, %v601
    %v603 = vpop.f32.mrf.mxu0
    %v604 = vadd.f32 %v555, %v603
    %605 = vdwg.mxu0
    %v606 = vmul.f32 %v597, %v597
    %v607 = vmul.f32 %v599, %v599
    %v608 = vmul.f32 %v602, %v602
    %v609 = vmul.f32 %v604, %v604
    %v611 = vsel %vm332, %v606, 0
    %v614 = vsel %vm332, %v607, 0
    %v617 = vsel %vm332, %v608, 0
    %v620 = vsel %vm332, %v609, 0
    %622 = vmatpush.msra.mxu0 0.0
    %623 = vmatpush.msra.mxu0 0.0
    %624 = vmatpush.msra.mxu0 0.0
    %625 = vmatpush.msra.mxu0 0.0
    %626 = vmatpush.msra.mxu0 0.0
    %627 = vmatpush.msra.mxu0 0.0
    %628 = vmatpush.msra.mxu0 0.0
    %629 = vmatpush.msra.mxu0 0.0
    %630 = vmatpush.msra.mxu0 %v197
    %631 = vmatpush.msra.mxu0 %v196
    %632 = vmatpush.msra.mxu0 %v195
    %633 = vmatpush.msra.mxu0 %v194
    %634 = vmatpush.msra.mxu0 %v193
    %635 = vmatpush.msra.mxu0 %v192
    %636 = vmatpush.msra.mxu0 %v191
    %637 = vmatpush.msra.mxu0 %v190
    %638 = vmatmul.f32.gmra.mxu0 %v611
    %v639 = vpop.f32.mrf.mxu0
    %v640 = vadd.f32 0.0, %v639
    %641 = vmatmul.f32.gmra.mxu0 %v614
    %v642 = vpop.f32.mrf.mxu0
    %v643 = vadd.f32 0.0, %v642
    %644 = vmatmul.f32.gmra.mxu0 %v617
    %v645 = vpop.f32.mrf.mxu0
    %v646 = vadd.f32 0.0, %v645
    %647 = vmatmul.f32.gmra.mxu0 %v620
    %v648 = vpop.f32.mrf.mxu0
    %v649 = vadd.f32 0.0, %v648
    %650 = vdwg.mxu0
    %v651 = vmax.f32 %v640, 1e-24
    %v652 = vmax.f32 %v643, 1e-24
    %v653 = vmax.f32 %v646, 1e-24
    %v654 = vmax.f32 %v649, 1e-24
    %v655 = vrsqrt.pop %v651
    %v656 = vmul.f32 %v655, %v651
    %v657 = vmul.f32 %v656, %v655
    %v658 = vmul.f32 0.5, %v657
    %v659 = vsub.f32 1.5, %v658
    %v660 = vmul.f32 %v655, %v659
    %vm661 = vweird.f32 %v651
    %vm662 = vweird.f32 %v655
    %vm663 = vmor %vm661, %vm662
    %v664 = vsel %vm663, %v655, %v660
    %v665 = vrsqrt.pop %v652
    %v666 = vmul.f32 %v665, %v652
    %v667 = vmul.f32 %v666, %v665
    %v668 = vmul.f32 0.5, %v667
    %v669 = vsub.f32 1.5, %v668
    %v670 = vmul.f32 %v665, %v669
    %vm671 = vweird.f32 %v652
    %vm672 = vweird.f32 %v665
    %vm673 = vmor %vm671, %vm672
    %v674 = vsel %vm673, %v665, %v670
    %v675 = vrsqrt.pop %v653
    %v676 = vmul.f32 %v675, %v653
    %v677 = vmul.f32 %v676, %v675
    %v678 = vmul.f32 0.5, %v677
    %v679 = vsub.f32 1.5, %v678
    %v680 = vmul.f32 %v675, %v679
    %vm681 = vweird.f32 %v653
    %vm682 = vweird.f32 %v675
    %vm683 = vmor %vm681, %vm682
    %v684 = vsel %vm683, %v675, %v680
    %v685 = vrsqrt.pop %v654
    %v686 = vmul.f32 %v685, %v654
    %v687 = vmul.f32 %v686, %v685
    %v688 = vmul.f32 0.5, %v687
    %v689 = vsub.f32 1.5, %v688
    %v690 = vmul.f32 %v685, %v689
    %vm691 = vweird.f32 %v654
    %vm692 = vweird.f32 %v685
    %vm693 = vmor %vm691, %vm692
    %v694 = vsel %vm693, %v685, %v690
    %v695 = vmul.f32 %v597, %v664
    %v696 = vmul.f32 %v599, %v674
    %v697 = vmul.f32 %v602, %v684
    %v698 = vmul.f32 %v604, %v694
    %v699 = vmax.f32 %v695, 0.0
    %v700 = vmax.f32 %v696, 0.0
    %v701 = vmax.f32 %v697, 0.0
    %v702 = vmax.f32 %v698, 0.0
    %v703 = vpack.c.bf16 %v700, %v699
    %v704 = vpack.c.bf16 %v702, %v701
    %v705 = vld [vmem:[#allocation4] sm:$0x3]
    %v707 = vsel %vm236, %v705, 0
    %709 = vmatpush.bf16.msra.mxu0 0
    %710 = vmatpush.bf16.msra.mxu0 0
    %711 = vmatpush.bf16.msra.mxu0 0
    %712 = vmatpush.bf16.msra.mxu0 0
    %713 = vmatpush.bf16.msra.mxu0 0
    %714 = vmatpush.bf16.msra.mxu0 0
    %715 = vmatpush.bf16.msra.mxu0 %v704
    %716 = vmatpush.bf16.msra.mxu0 %v703
    %717 = vmatmul.bf16.gmra.mxu0 %v707
    %v718 = vpop.f32.mrf.mxu0
    %v719 = vadd.f32 0.0, %v718
    %v720 = vpop.f32.mrf.mxu0
    %721 = vdwg.mxu0
    %v722 = vld [vmem:[#allocation15] sm:$0xf]
    %v723 = vld [vmem:[#allocation15 + $0x4] sm:$0xf]
    %v724 = vld [vmem:[#allocation15 + $0x8] sm:$0xf]
    %v725 = vld [vmem:[#allocation15 + $0xc] sm:$0xf]
    %v726 = vld [vmem:[#allocation15 + $0x10] sm:$0xf]
    %v727 = vld [vmem:[#allocation15 + $0x14] sm:$0xf]
    %v728 = vld [vmem:[#allocation15 + $0x18] sm:$0xf]
    %v729 = vld [vmem:[#allocation15 + $0x1c] sm:$0xf]
    %v730 = vld [vmem:[%s13] sm:$0x1]
    %v731 = vld [vmem:[%s14] sm:$0xf]
    %v732 = vld [vmem:[%s14 + $0x4] sm:$0xf]
    %v733 = vld [vmem:[%s14 + $0x8] sm:$0xf]
    %v734 = vld [vmem:[%s14 + $0xc] sm:$0xf]
    %v735 = vld [vmem:[%s14 + $0x10] sm:$0xf]
    %v736 = vld [vmem:[%s14 + $0x14] sm:$0xf]
    %v737 = vld [vmem:[%s14 + $0x18] sm:$0xf]
    %v738 = vld [vmem:[%s14 + $0x1c] sm:$0xf]
    %v739 = vld [vmem:[%s15] sm:$0x1]
    %v740 = vpack.c.bf16 %v719, %v719
    %v742 = vperm.slane %v730, 0
    %v752 = vunpack.c.l.b16 %v722
    %v753 = vunpack.c.l.b16 %v723
    %v754 = vunpack.c.l.b16 %v724
    %v755 = vunpack.c.l.b16 %v725
    %v756 = vunpack.c.l.b16 %v726
    %v757 = vunpack.c.l.b16 %v727
    %v758 = vunpack.c.l.b16 %v728
    %v759 = vunpack.c.l.b16 %v729
    %v760 = vpack.c.b16 %v753, %v752
    %v761 = vpack.c.b16 %v755, %v754
    %v762 = vpack.c.b16 %v757, %v756
    %v763 = vpack.c.b16 %v759, %v758
    %v769 = vsel %vm332, %v740, 0
    %771 = vmatpush.bf16.msra.mxu0 0
    %772 = vmatpush.bf16.msra.mxu0 0
    %773 = vmatpush.bf16.msra.mxu0 0
    %774 = vmatpush.bf16.msra.mxu0 0
    %775 = vmatpush.bf16.msra.mxu0 %v763
    %776 = vmatpush.bf16.msra.mxu0 %v762
    %777 = vmatpush.bf16.msra.mxu0 %v761
    %778 = vmatpush.bf16.msra.mxu0 %v760
    %779 = vmatmul.bf16.gmra.mxu0 %v769
    %v780 = vpop.f32.mrf.mxu0
    %v781 = vadd.f32 %v742, %v780
    %v782 = vpop.f32.mrf.mxu0
    %783 = vdwg.mxu0
    %v784 = vmax.f32 %v781, 0.0
    %v785 = vpack.c.bf16 %v784, %v784
    %v787 = vperm.slane %v739, 0
    %v797 = vunpack.c.l.b16 %v731
    %v798 = vunpack.c.l.b16 %v732
    %v799 = vunpack.c.l.b16 %v733
    %v800 = vunpack.c.l.b16 %v734
    %v801 = vunpack.c.l.b16 %v735
    %v802 = vunpack.c.l.b16 %v736
    %v803 = vunpack.c.l.b16 %v737
    %v804 = vunpack.c.l.b16 %v738
    %v805 = vpack.c.b16 %v798, %v797
    %v806 = vpack.c.b16 %v800, %v799
    %v807 = vpack.c.b16 %v802, %v801
    %v808 = vpack.c.b16 %v804, %v803
    %v814 = vsel %vm332, %v785, 0
    %816 = vmatpush.bf16.msra.mxu0 0
    %817 = vmatpush.bf16.msra.mxu0 0
    %818 = vmatpush.bf16.msra.mxu0 0
    %819 = vmatpush.bf16.msra.mxu0 0
    %820 = vmatpush.bf16.msra.mxu0 %v808
    %821 = vmatpush.bf16.msra.mxu0 %v807
    %822 = vmatpush.bf16.msra.mxu0 %v806
    %823 = vmatpush.bf16.msra.mxu0 %v805
    %824 = vmatmul.bf16.gmra.mxu0 %v814
    %v825 = vpop.f32.mrf.mxu0
    %v826 = vadd.f32 %v787, %v825
    %v827 = vpop.f32.mrf.mxu0
    %828 = vdwg.mxu0
    %vm829 = vcmask 11264
    %830 = vst.msk [vmem:[%s16] sm:$0xf] %vm829, %v826
    // Predicated region
    $region102: #{gnn_forward_pallas.1} parent=1 // pred_check
      _
    $region103: #{gnn_forward_pallas.1} parent=1 // pred_check_branch
      %832 = sbr.rel (0) target = $region105
    $region104: #{gnn_forward_pallas.1} parent=1 // pred_region
      _
    $region105: #{gnn_forward_pallas.1} parent=1 // pred_fallthru
      _
    // Predicated region
    $region106: #{gnn_forward_pallas.1} parent=1 // pred_check
      _
    $region107: #{gnn_forward_pallas.1} parent=1 // pred_check_branch
      %834 = sbr.rel (0) target = $region109
    $region108: #{gnn_forward_pallas.1} parent=1 // pred_region
      _
    $region109: #{gnn_forward_pallas.1} parent=1 // pred_fallthru
      _
    %835 = vsyncpa [#allocation3], 1
    %836 = vsyncpa [#allocation5], 1
    %837 = vsyncpa [#allocation8], 1
    %838 = vsyncpa [#allocation11], 1
    %839 = vsyncpa [#allocation14], 1

</llo_original>
